<compile_context>
chip_gen: v7x
topology: tpu7x:2x2x1
jax: 0.10.0
libtpu: 0.0.40
codegen_flags: <defaults>
</compile_context>

<pallas_src>
import jax
import jax.numpy as jnp
from jax.experimental import pallas as pl
from jax.experimental.pallas import tpu as pltpu

HIDDEN_SIZE = 32
OUTPUT_SIZE = 48
LANE = 128          # TPU lane width; every last-dim block is padded to this
NEG = -1e30         # mask value for padded vocab logits


def _gru_decode_kernel(tok_ref, emb_ref, h0_ref, wg_ref, bg_ref,
                       wo_ref, bo_ref, a_ref,
                       logp_ref, hout_ref, h_scr):
    """One decode step of the fused GRU decoder (grid axis = time).

    tok_ref : (T,)        int32 token ids        (scalar prefetch, SMEM)
    emb_ref : (V, 128)    embedding table, cols [0:H] valid      (VMEM)
    h0_ref  : (1, 128)    initial hidden, cols [0:H] valid       (VMEM)
    wg_ref  : (256, 512)  fused gate weights: rows [0:H]=x-part, [128:128+H]=h-part;
                          col blocks: [0:128]=r(ih+hh), [128:256]=z(ih+hh),
                          [256:384]=gi_n (ih only), [384:512]=gh_n (hh only)
    bg_ref  : (1, 512)    fused gate bias (same col blocks)
    wo_ref  : (128, 128)  output projection, [0:H, 0:V] valid
    bo_ref  : (1, 128)    output bias, cols [0:V] valid, rest = NEG (mask)
    a_ref   : (1,)        PReLU slope (SMEM)
    logp_ref: (T, 128)    log-softmax rows (resident across the grid)
    hout_ref: (1, 128)    final hidden state
    h_scr   : (1, 128)    hidden-state carrier (VMEM scratch)
    """
    t = pl.program_id(0)

    @pl.when(t == 0)
    def _init():
        h_scr[...] = h0_ref[...]

    # Embedding lookup (in-kernel gather on the sublane dim) + PReLU.
    tok = tok_ref[t]
    x = emb_ref[pl.ds(tok, 1), :]                 # (1, 128)
    a = a_ref[0]
    x = jnp.where(x > 0, x, a * x)                # single shared PReLU slope

    h = h_scr[...]                                # (1, 128), padded lanes stay 0

    # One fused MXU matmul for all GRU gate pre-activations.
    xh = jnp.concatenate([x, h], axis=1)          # (1, 256)
    g = jnp.dot(xh, wg_ref[...], preferred_element_type=jnp.float32) + bg_ref[...]

    # PyTorch GRU gate ordering: r, z, n   (n uses gi_n + r * gh_n)
    r = jax.nn.sigmoid(g[:, 0:LANE])
    z = jax.nn.sigmoid(g[:, LANE:2 * LANE])
    n = jnp.tanh(g[:, 2 * LANE:3 * LANE] + r * g[:, 3 * LANE:4 * LANE])
    h_new = (1.0 - z) * n + z * h                 # padded lanes remain exactly 0

    # Output projection + log-softmax (padded vocab lanes are NEG -> exp == 0).
    logits = jnp.dot(h_new, wo_ref[...], preferred_element_type=jnp.float32) + bo_ref[...]
    m = jnp.max(logits, axis=1, keepdims=True)
    lse = jnp.log(jnp.sum(jnp.exp(logits - m), axis=1, keepdims=True))

    logp_ref[pl.ds(t, 1), :] = logits - m - lse
    h_scr[...] = h_new
    hout_ref[...] = h_new


def prepare_decoder_params(params):
    """One-time layout prep: pad / transpose / fuse weights (no per-call work)."""
    H, V = HIDDEN_SIZE, OUTPUT_SIZE
    emb, w_ih, w_hh = params["embedding"], params["w_ih"], params["w_hh"]
    b_ih, b_hh = params["b_ih"], params["b_hh"]
    w_out, b_out = params["w_out"], params["b_out"]

    emb_pad = jnp.zeros((V, LANE), jnp.float32).at[:, :H].set(emb)

    # Fused gate matrix (2*128, 4*128): LHS is [x | h] padded to 256 lanes.
    wg = jnp.zeros((2 * LANE, 4 * LANE), jnp.float32)
    wg = wg.at[0:H, 0:H].set(w_ih[0:H].T)                               # r (x part)
    wg = wg.at[LANE:LANE + H, 0:H].set(w_hh[0:H].T)                     # r (h part)
    wg = wg.at[0:H, LANE:LANE + H].set(w_ih[H:2 * H].T)                 # z (x part)
    wg = wg.at[LANE:LANE + H, LANE:LANE + H].set(w_hh[H:2 * H].T)       # z (h part)
    wg = wg.at[0:H, 2 * LANE:2 * LANE + H].set(w_ih[2 * H:3 * H].T)     # gi_n
    wg = wg.at[LANE:LANE + H, 3 * LANE:3 * LANE + H].set(w_hh[2 * H:3 * H].T)  # gh_n

    bg = jnp.zeros((1, 4 * LANE), jnp.float32)
    bg = bg.at[0, 0:H].set(b_ih[0:H] + b_hh[0:H])
    bg = bg.at[0, LANE:LANE + H].set(b_ih[H:2 * H] + b_hh[H:2 * H])
    bg = bg.at[0, 2 * LANE:2 * LANE + H].set(b_ih[2 * H:3 * H])
    bg = bg.at[0, 3 * LANE:3 * LANE + H].set(b_hh[2 * H:3 * H])

    wo = jnp.zeros((LANE, LANE), jnp.float32).at[:H, :V].set(w_out.T)
    bo = jnp.full((1, LANE), NEG, jnp.float32).at[0, :V].set(b_out)

    return {"emb": emb_pad, "w_gate": wg, "b_gate": bg,
            "w_out": wo, "b_out": bo,
            "prelu_a": params["prelu_a"].reshape(1).astype(jnp.float32)}


def gru_decoder_decode(tokens, hidden, prepped):
    """Fused T-step decode. tokens: (T,) int32, hidden: (1,1,H) f32.

    Returns (log_probs (T, V), final_hidden (1, 1, H)).
    """
    H, V = HIDDEN_SIZE, OUTPUT_SIZE
    T = tokens.shape[0]
    h0 = jnp.zeros((1, LANE), jnp.float32).at[:, :H].set(hidden.reshape(1, H))

    grid_spec = pltpu.PrefetchScalarGridSpec(
        num_scalar_prefetch=1,
        grid=(T,),
        in_specs=[
            pl.BlockSpec((V, LANE), lambda t, toks: (0, 0)),              # embedding
            pl.BlockSpec((1, LANE), lambda t, toks: (0, 0)),              # h0
            pl.BlockSpec((2 * LANE, 4 * LANE), lambda t, toks: (0, 0)),   # fused gate W
            pl.BlockSpec((1, 4 * LANE), lambda t, toks: (0, 0)),          # fused gate b
            pl.BlockSpec((LANE, LANE), lambda t, toks: (0, 0)),           # W_out
            pl.BlockSpec((1, LANE), lambda t, toks: (0, 0)),              # b_out
            pl.BlockSpec(memory_space=pltpu.MemorySpace.SMEM),            # PReLU slope
        ],
        out_specs=(
            pl.BlockSpec((T, LANE), lambda t, toks: (0, 0)),              # log-probs (resident)
            pl.BlockSpec((1, LANE), lambda t, toks: (0, 0)),              # final hidden
        ),
        scratch_shapes=[pltpu.VMEM((1, LANE), jnp.float32)],              # hidden carrier
    )

    logp_pad, h_pad = pl.pallas_call(
        _gru_decode_kernel,
        out_shape=(
            jax.ShapeDtypeStruct((T, LANE), jnp.float32),
            jax.ShapeDtypeStruct((1, LANE), jnp.float32),
        ),
        grid_spec=grid_spec,
        compiler_params=pltpu.CompilerParams(
            dimension_semantics=("arbitrary",)),   # sequential recurrence
    )(tokens.astype(jnp.int32), prepped["emb"], h0, prepped["w_gate"],
      prepped["b_gate"], prepped["w_out"], prepped["b_out"], prepped["prelu_a"])

    return logp_pad[:, :V], h_pad[:, :H].reshape(1, 1, H)


def gru_decoder_forward(token, hidden, prepped):
    """Exact analogue of GRUDecoder.forward(input, hidden): one step."""
    logp, h_new = gru_decoder_decode(jnp.reshape(token, (1,)), hidden, prepped)
    return logp, h_new  # (1, V), (1, 1, H)


# ----------------------------- reference & test -----------------------------

def _reference_step(token, h, params):
    """Pure-JAX single GRUDecoder step matching PyTorch semantics."""
    H = HIDDEN_SIZE
    x = params["embedding"][token].reshape(1, H)
    a = params["prelu_a"][0]
    x = jnp.where(x > 0, x, a * x)
    gi = x @ params["w_ih"].T + params["b_ih"]
    gh = h @ params["w_hh"].T + params["b_hh"]
    r = jax.nn.sigmoid(gi[:, 0:H] + gh[:, 0:H])
    z = jax.nn.sigmoid(gi[:, H:2 * H] + gh[:, H:2 * H])
    n = jnp.tanh(gi[:, 2 * H:3 * H] + r * gh[:, 2 * H:3 * H])
    h_new = (1.0 - z) * n + z * h
    logits = h_new @ params["w_out"].T + params["b_out"]
    return jax.nn.log_softmax(logits, axis=1), h_new


def _init_params(key):
    H, V = HIDDEN_SIZE, OUTPUT_SIZE
    ks = jax.random.split(key, 7)
    return {
        "embedding": 0.1 * jax.random.normal(ks[0], (V, H), jnp.float32),
        "w_ih": 0.1 * jax.random.normal(ks[1], (3 * H, H), jnp.float32),
        "w_hh": 0.1 * jax.random.normal(ks[2], (3 * H, H), jnp.float32),
        "b_ih": 0.1 * jax.random.normal(ks[3], (3 * H,), jnp.float32),
        "b_hh": 0.1 * jax.random.normal(ks[4], (3 * H,), jnp.float32),
        "w_out": 0.1 * jax.random.normal(ks[5], (V, H), jnp.float32),
        "b_out": 0.1 * jax.random.normal(ks[6], (V,), jnp.float32),
        "prelu_a": jnp.array([0.25], jnp.float32),  # nn.PReLU() default init
    }


if __name__ == "__main__":
    key = jax.random.PRNGKey(0)
    pkey, tkey, hkey = jax.random.split(key, 3)

    params = _init_params(pkey)
    prepped = prepare_decoder_params(params)   # one-time layout prep (not per call)

    T = 8
    tokens = jax.random.randint(tkey, (T,), 0, OUTPUT_SIZE, jnp.int32)
    hidden = 0.1 * jax.random.normal(hkey, (1, 1, HIDDEN_SIZE), jnp.float32)

    # Fused multi-step decode (one pallas_call for the whole sequence).
    decode = jax.jit(gru_decoder_decode)
    logp, h_final = jax.block_until_ready(decode(tokens, hidden, prepped))

    # Reference: run the single-step reference T times (teacher-forced tokens).
    h = hidden.reshape(1, HIDDEN_SIZE)
    ref_rows = []
    for t in range(T):
        lp, h = _reference_step(tokens[t], h, params)
        ref_rows.append(lp)
    ref_logp = jnp.concatenate(ref_rows, axis=0)
    ref_h = h.reshape(1, 1, HIDDEN_SIZE)

    assert logp.shape == (T, OUTPUT_SIZE)
    assert h_final.shape == (1, 1, HIDDEN_SIZE)
    assert jnp.allclose(logp, ref_logp, atol=1e-5, rtol=1e-5)
    assert jnp.allclose(h_final, ref_h, atol=1e-5, rtol=1e-5)

    # Single-step API, equivalent to GRUDecoder.forward(input, hidden).
    step_logp, step_h = jax.block_until_ready(
        jax.jit(gru_decoder_forward)(tokens[0], hidden, prepped))
    ref_lp0, ref_h0 = _reference_step(tokens[0], hidden.reshape(1, HIDDEN_SIZE), params)
    assert step_logp.shape == (1, OUTPUT_SIZE)
    assert step_h.shape == (1, 1, HIDDEN_SIZE)
    assert jnp.allclose(step_logp, ref_lp0, atol=1e-5, rtol=1e-5)
    assert jnp.allclose(step_h, ref_h0.reshape(1, 1, HIDDEN_SIZE), atol=1e-5, rtol=1e-5)

    print("KERNEL_OK")
</pallas_src>

<mosaic_0001>
module attributes {stable_mosaic.version = 11 : i64} {
  func.func @_gru_decode_kernel(%arg0: i32, %arg1: memref<8xi32, #tpu.memory_space<smem>>, %arg2: memref<48x128xf32, #tpu.memory_space<vmem>>, %arg3: memref<1x128xf32, #tpu.memory_space<vmem>>, %arg4: memref<256x512xf32, #tpu.memory_space<vmem>>, %arg5: memref<1x512xf32, #tpu.memory_space<vmem>>, %arg6: memref<128x128xf32, #tpu.memory_space<vmem>>, %arg7: memref<1x128xf32, #tpu.memory_space<vmem>>, %arg8: memref<1xf32, #tpu.memory_space<smem>>, %arg9: memref<8x128xf32, #tpu.memory_space<vmem>>, %arg10: memref<1x128xf32, #tpu.memory_space<vmem>>, %arg11: memref<1x128xf32, #tpu.memory_space<vmem>>) attributes {dimension_semantics = [#tpu.dimension_semantics<arbitrary>], iteration_bounds = array<i64: 8>, scalar_prefetch = 1 : i64, scratch_operands = 1 : i64, tpu.core_type = #tpu.core_type<tc>, window_params = [{pipeline_mode = #tpu.pipeline_mode<synchronous>, transform_indices = @transform_0, window_bounds = array<i64: 48, 128>}, {pipeline_mode = #tpu.pipeline_mode<synchronous>, transform_indices = @transform_1, window_bounds = array<i64: 1, 128>}, {pipeline_mode = #tpu.pipeline_mode<synchronous>, transform_indices = @transform_2, window_bounds = array<i64: 256, 512>}, {pipeline_mode = #tpu.pipeline_mode<synchronous>, transform_indices = @transform_3, window_bounds = array<i64: 1, 512>}, {pipeline_mode = #tpu.pipeline_mode<synchronous>, transform_indices = @transform_4, window_bounds = array<i64: 128, 128>}, {pipeline_mode = #tpu.pipeline_mode<synchronous>, transform_indices = @transform_5, window_bounds = array<i64: 1, 128>}, {transform_indices = @transform_6, window_bounds = array<i64: 1>}, {pipeline_mode = #tpu.pipeline_mode<synchronous>, transform_indices = @transform_7, window_bounds = array<i64: 8, 128>}, {pipeline_mode = #tpu.pipeline_mode<synchronous>, transform_indices = @transform_8, window_bounds = array<i64: 1, 128>}]} {
    %c0_i32 = arith.constant 0 : i32
    %0 = arith.cmpi eq, %arg0, %c0_i32 : i32
    %1 = arith.extui %0 : i1 to i32
    %c0_i32_0 = arith.constant 0 : i32
    %2 = arith.cmpi ne, %1, %c0_i32_0 : i32
    scf.if %2 {
      %c0_24 = arith.constant 0 : index
      %c0_25 = arith.constant 0 : index
      %61 = vector.load %arg3[%c0_24, %c0_25] : memref<1x128xf32, #tpu.memory_space<vmem>>, vector<1x128xf32>
      %c0_26 = arith.constant 0 : index
      %c0_27 = arith.constant 0 : index
      %62 = vector.load %arg11[%c0_26, %c0_27] : memref<1x128xf32, #tpu.memory_space<vmem>>, vector<1x128xf32>
      tpu.vector_store %arg11[%c0_26, %c0_27], %61 {strides = array<i32>} : memref<1x128xf32, #tpu.memory_space<vmem>>, vector<1x128xf32>,
    } else {
    }
    %3 = arith.index_cast %arg0 : i32 to index
    %4 = memref.load %arg1[%3] : memref<8xi32, #tpu.memory_space<smem>>
    %5 = arith.index_cast %4 : i32 to index
    %c0 = arith.constant 0 : index
    %6 = vector.load %arg2[%5, %c0] : memref<48x128xf32, #tpu.memory_space<vmem>>, vector<1x128xf32>
    %c0_1 = arith.constant 0 : index
    %7 = memref.load %arg8[%c0_1] : memref<1xf32, #tpu.memory_space<smem>>
    %cst = arith.constant 0.000000e+00 : f32
    %8 = vector.broadcast %cst : f32 to vector<1x128xf32>
    %9 = arith.cmpf ogt, %6, %8 : vector<1x128xf32>
    %10 = vector.broadcast %7 : f32 to vector<1x128xf32>
    %11 = arith.mulf %10, %6 : vector<1x128xf32>
    %12 = arith.select %9, %6, %11 : vector<1x128xi1>, vector<1x128xf32>
    %c0_2 = arith.constant 0 : index
    %c0_3 = arith.constant 0 : index
    %13 = vector.load %arg11[%c0_2, %c0_3] : memref<1x128xf32, #tpu.memory_space<vmem>>, vector<1x128xf32>
    %14 = tpu.concatenate %12, %13 in 1 : vector<1x128xf32>, vector<1x128xf32> -> vector<1x256xf32>
    %c0_4 = arith.constant 0 : index
    %c0_5 = arith.constant 0 : index
    %15 = vector.load %arg4[%c0_4, %c0_5] : memref<256x512xf32, #tpu.memory_space<vmem>>, vector<256x512xf32>
    %cst_6 = arith.constant dense<0.000000e+00> : vector<1x512xf32>
    %16 = tpu.matmul %14, %15, %cst_6 {dimension_numbers = #tpu.dot_dimension_numbers<[1], [0], [0], [1], [0, 0, 1, 1], [], []>} : vector<1x256xf32>, vector<256x512xf32>, vector<1x512xf32> -> vector<1x512xf32>
    %c0_7 = arith.constant 0 : index
    %c0_8 = arith.constant 0 : index
    %17 = vector.load %arg5[%c0_7, %c0_8] : memref<1x512xf32, #tpu.memory_space<vmem>>, vector<1x512xf32>
    %18 = arith.addf %16, %17 : vector<1x512xf32>
    %19 = vector.extract_strided_slice %18 {offsets = [0, 0], sizes = [1, 128], strides = [1, 1]} : vector<1x512xf32> to vector<1x128xf32>
    %20 = arith.negf %19 : vector<1x128xf32>
    %21 = math.exp %20 : vector<1x128xf32>
    %cst_9 = arith.constant 1.000000e+00 : f32
    %22 = vector.broadcast %cst_9 : f32 to vector<1x128xf32>
    %23 = arith.addf %22, %21 : vector<1x128xf32>
    %24 = arith.divf %22, %23 : vector<1x128xf32>
    %25 = vector.extract_strided_slice %18 {offsets = [0, 128], sizes = [1, 128], strides = [1, 1]} : vector<1x512xf32> to vector<1x128xf32>
    %26 = arith.negf %25 : vector<1x128xf32>
    %27 = math.exp %26 : vector<1x128xf32>
    %cst_10 = arith.constant 1.000000e+00 : f32
    %28 = vector.broadcast %cst_10 : f32 to vector<1x128xf32>
    %29 = arith.addf %28, %27 : vector<1x128xf32>
    %30 = arith.divf %28, %29 : vector<1x128xf32>
    %31 = vector.extract_strided_slice %18 {offsets = [0, 256], sizes = [1, 128], strides = [1, 1]} : vector<1x512xf32> to vector<1x128xf32>
    %32 = vector.extract_strided_slice %18 {offsets = [0, 384], sizes = [1, 128], strides = [1, 1]} : vector<1x512xf32> to vector<1x128xf32>
    %33 = arith.mulf %24, %32 : vector<1x128xf32>
    %34 = arith.addf %31, %33 : vector<1x128xf32>
    %35 = math.tanh %34 : vector<1x128xf32>
    %cst_11 = arith.constant 1.000000e+00 : f32
    %36 = vector.broadcast %cst_11 : f32 to vector<1x128xf32>
    %37 = arith.subf %36, %30 : vector<1x128xf32>
    %38 = arith.mulf %37, %35 : vector<1x128xf32>
    %39 = arith.mulf %30, %13 : vector<1x128xf32>
    %40 = arith.addf %38, %39 : vector<1x128xf32>
    %c0_12 = arith.constant 0 : index
    %c0_13 = arith.constant 0 : index
    %41 = vector.load %arg6[%c0_12, %c0_13] : memref<128x128xf32, #tpu.memory_space<vmem>>, vector<128x128xf32>
    %cst_14 = arith.constant dense<0.000000e+00> : vector<1x128xf32>
    %42 = tpu.matmul %40, %41, %cst_14 {dimension_numbers = #tpu.dot_dimension_numbers<[1], [0], [0], [1], [0, 0, 1, 1], [], []>} : vector<1x128xf32>, vector<128x128xf32>, vector<1x128xf32> -> vector<1x128xf32>
    %c0_15 = arith.constant 0 : index
    %c0_16 = arith.constant 0 : index
    %43 = vector.load %arg7[%c0_15, %c0_16] : memref<1x128xf32, #tpu.memory_space<vmem>>, vector<1x128xf32>
    %44 = arith.addf %42, %43 : vector<1x128xf32>
    %cst_17 = arith.constant dense<0xFF800000> : vector<1xf32>
    %45 = vector.multi_reduction <maximumf>, %44, %cst_17 [1] : vector<1x128xf32> to vector<1xf32>
    %46 = vector.shape_cast %45 : vector<1xf32> to vector<1x1xf32>
    %47 = vector.broadcast %46 : vector<1x1xf32> to vector<1x128xf32>
    %48 = arith.subf %44, %47 : vector<1x128xf32>
    %49 = math.exp %48 : vector<1x128xf32>
    %cst_18 = arith.constant dense<0.000000e+00> : vector<1xf32>
    %50 = vector.multi_reduction <add>, %49, %cst_18 [1] : vector<1x128xf32> to vector<1xf32>
    %51 = vector.shape_cast %50 : vector<1xf32> to vector<1x1xf32>
    %52 = math.log %51 : vector<1x1xf32>
    %53 = vector.broadcast %46 : vector<1x1xf32> to vector<1x128xf32>
    %54 = arith.subf %44, %53 : vector<1x128xf32>
    %55 = vector.broadcast %52 : vector<1x1xf32> to vector<1x128xf32>
    %56 = arith.subf %54, %55 : vector<1x128xf32>
    %57 = arith.index_cast %arg0 : i32 to index
    %c0_19 = arith.constant 0 : index
    %58 = vector.load %arg9[%57, %c0_19] : memref<8x128xf32, #tpu.memory_space<vmem>>, vector<1x128xf32>
    tpu.vector_store %arg9[%57, %c0_19], %56 {strides = array<i32>} : memref<8x128xf32, #tpu.memory_space<vmem>>, vector<1x128xf32>,
    %c0_20 = arith.constant 0 : index
    %c0_21 = arith.constant 0 : index
    %59 = vector.load %arg11[%c0_20, %c0_21] : memref<1x128xf32, #tpu.memory_space<vmem>>, vector<1x128xf32>
    tpu.vector_store %arg11[%c0_20, %c0_21], %40 {strides = array<i32>} : memref<1x128xf32, #tpu.memory_space<vmem>>, vector<1x128xf32>,
    %c0_22 = arith.constant 0 : index
    %c0_23 = arith.constant 0 : index
    %60 = vector.load %arg10[%c0_22, %c0_23] : memref<1x128xf32, #tpu.memory_space<vmem>>, vector<1x128xf32>
    tpu.vector_store %arg10[%c0_22, %c0_23], %40 {strides = array<i32>} : memref<1x128xf32, #tpu.memory_space<vmem>>, vector<1x128xf32>,
    return
  }
  func.func @transform_0(%arg0: i32, %arg1: memref<8xi32, #tpu.memory_space<smem>>) -> (i32, i32) {
    %c0_i32 = arith.constant 0 : i32
    %c0_i32_0 = arith.constant 0 : i32
    %c0_i32_1 = arith.constant 0 : i32
    return %c0_i32, %c0_i32_0 : i32, i32
  }
  func.func @transform_1(%arg0: i32, %arg1: memref<8xi32, #tpu.memory_space<smem>>) -> (i32, i32) {
    %c0_i32 = arith.constant 0 : i32
    %c0_i32_0 = arith.constant 0 : i32
    %c0_i32_1 = arith.constant 0 : i32
    return %c0_i32, %c0_i32_0 : i32, i32
  }
  func.func @transform_2(%arg0: i32, %arg1: memref<8xi32, #tpu.memory_space<smem>>) -> (i32, i32) {
    %c0_i32 = arith.constant 0 : i32
    %c0_i32_0 = arith.constant 0 : i32
    %c0_i32_1 = arith.constant 0 : i32
    return %c0_i32, %c0_i32_0 : i32, i32
  }
  func.func @transform_3(%arg0: i32, %arg1: memref<8xi32, #tpu.memory_space<smem>>) -> (i32, i32) {
    %c0_i32 = arith.constant 0 : i32
    %c0_i32_0 = arith.constant 0 : i32
    %c0_i32_1 = arith.constant 0 : i32
    return %c0_i32, %c0_i32_0 : i32, i32
  }
  func.func @transform_4(%arg0: i32, %arg1: memref<8xi32, #tpu.memory_space<smem>>) -> (i32, i32) {
    %c0_i32 = arith.constant 0 : i32
    %c0_i32_0 = arith.constant 0 : i32
    %c0_i32_1 = arith.constant 0 : i32
    return %c0_i32, %c0_i32_0 : i32, i32
  }
  func.func @transform_5(%arg0: i32, %arg1: memref<8xi32, #tpu.memory_space<smem>>) -> (i32, i32) {
    %c0_i32 = arith.constant 0 : i32
    %c0_i32_0 = arith.constant 0 : i32
    %c0_i32_1 = arith.constant 0 : i32
    return %c0_i32, %c0_i32_0 : i32, i32
  }
  func.func @transform_6(%arg0: i32, %arg1: memref<8xi32, #tpu.memory_space<smem>>) -> i32 {
    %c0_i32 = arith.constant 0 : i32
    %c0_i32_0 = arith.constant 0 : i32
    return %c0_i32 : i32
  }
  func.func @transform_7(%arg0: i32, %arg1: memref<8xi32, #tpu.memory_space<smem>>) -> (i32, i32) {
    %c0_i32 = arith.constant 0 : i32
    %c0_i32_0 = arith.constant 0 : i32
    %c0_i32_1 = arith.constant 0 : i32
    return %c0_i32, %c0_i32_0 : i32, i32
  }
  func.func @transform_8(%arg0: i32, %arg1: memref<8xi32, #tpu.memory_space<smem>>) -> (i32, i32) {
    %c0_i32 = arith.constant 0 : i32
    %c0_i32_0 = arith.constant 0 : i32
    %c0_i32_1 = arith.constant 0 : i32
    return %c0_i32, %c0_i32_0 : i32, i32
  }
}

</mosaic_0001>

<llo_original>
// kernel: gru_decoder_decode.1
$region0: #{gru_decoder_decode.1}
  #allocation0 [shape = 'u32[]', space=smem, size = 0x4, offset = 0x4, fixed_abs, tag = 'smem constant byte address 0x4 - core index']
  #allocation1 [shape = 'u32[144,128]{1,0:T(1,128)}', space=vmem, size = 0x12000, scoped, tag = 'internal scratch']
  #allocation2 [shape = 'f32[1,128]{1,0:T(1,128)}', space=vmem, size = 0x200, scoped, tag = 'scratch operand']
  #allocation3 [shape = 's32[1]{0}', space=sflag, size = 0x4, scoped, tag = 'scoped memory for gru_decoder_decode.1']
  #allocation4 [shape = 'u8[512]{0}', space=smem, size = 0x200, scoped, tag = 'prefetched SMEM operand 0']
  #allocation5 [shape = 'f32[1]{0:T(128)S(6)}', space=smem, size = 0x200, scoped, tag = 'scoped memory for gru_decoder_decode.1']
  %s0 = inlined_call_operand.vmem [shape: s32[8], index: 0, kind: input, shape index: {}]
  %s1 = inlined_call_operand.hbm [shape: f32[48,128], index: 1, kind: input, shape index: {}]
  %s2 = inlined_call_operand.vmem [shape: f32[1,128], index: 2, kind: input, shape index: {}]
  %s3 = inlined_call_operand.hbm [shape: f32[256,512], index: 3, kind: input, shape index: {}]
  %s4 = inlined_call_operand.vmem [shape: f32[1,512], index: 4, kind: input, shape index: {}]
  %s5 = inlined_call_operand.hbm [shape: f32[128,128], index: 5, kind: input, shape index: {}]
  %s6 = inlined_call_operand.vmem [shape: f32[1,128], index: 6, kind: input, shape index: {}]
  %s7 = inlined_call_operand.<no memory space> [shape: f32[1], index: 7, kind: input, shape index: {}]
  %s8 = inlined_call_operand.hbm [shape: f32[8,128], index: 8, kind: output, shape index: {0}]
  %s9 = inlined_call_operand.vmem [shape: f32[1,128], index: 9, kind: output, shape index: {1}]
  %10 = xla_tuple %s8, %s9
  %s11 = sld [smem:[#allocation0]]
  $region85: #{gru_decoder_decode.1} parent=0
    _
  %s13 = ssub.s32 1, %s11
  %s14 = scalar_select 0, %s13, %s11
  %s15 = sshll.u32 %s0, 4
  %s16 = int_to_ptr.vmem [resolvable:$true] %s15
  %18 = dma.vmem_to_smem %s16, 16, [#allocation4], [#allocation3]
  %19 = sst [smem:[#allocation5]] %s7
  %20 = dma.done [#allocation3], 16
  %21 = sfence
  $region1: #{gru_decoder_decode.1} parent=0
    #allocation6 [shape = 'u8[24576]{0}', space=vmem, size = 0x6000, scoped, tag = 'input window, operand 1, single buffered']
    #allocation7 [shape = 's32[2]{0}', space=sflag, size = 0x8, scoped, tag = 'scoped memory for gru_decoder_decode.1']
    #allocation8 [shape = 's32[2]{0}', space=sflag, size = 0x8, scoped, tag = 'scoped memory for gru_decoder_decode.1']
    #allocation9 [shape = 'u8[524288]{0}', space=vmem, size = 0x80000, scoped, tag = 'input window, operand 3, single buffered']
    #allocation10 [shape = 's32[1]{0}', space=sflag, size = 0x4, scoped, tag = 'scoped memory for gru_decoder_decode.1']
    #allocation11 [shape = 'u8[65536]{0}', space=vmem, size = 0x10000, scoped, tag = 'input window, operand 5, single buffered']
    #allocation12 [shape = 'u8[4096]{0}', space=vmem, size = 0x1000, scoped, tag = 'output window, operand 0, single buffered']
    %22 = vsyncpa [#allocation7], 0
    %23 = vsyncpa [#allocation10], 0
    %24 = vsyncpa [#allocation8], 0
    loop: start=0, step=1, limit=10
    $region2: #{gru_decoder_decode.1} parent=1 // loop_pre_header
      _
    $region3: #{gru_decoder_decode.1} parent=1 // loop_header
      %s26 = sphi 0, %s30
      %p27 = scmp.ge.s32.totalorder %s26, 10
      %s34 = sphi 0, %s34
      %s36 = sphi 0, %s34
      %s37 = sphi 0, %s36
      %s51 = sphi 0, %s37
      %s55 = sphi 0, %s55
      %s57 = sphi 0, %s55
      %s58 = sphi 0, %s57
      %s72 = sphi 0, %s58
      %s76 = sphi 0, %s76
      %s78 = sphi 0, %s76
      %s79 = sphi 0, %s78
      %s93 = sphi 0, %s79
      %s97 = sphi 0, %s97
      %s99 = sphi 0, %s97
      %s100 = sphi 0, %s99
      %s114 = sphi 0, %s100
      %s118 = sphi 0, %s118
      %s120 = sphi 0, %s118
      %s121 = sphi 0, %s120
      %s135 = sphi 0, %s121
      %s139 = sphi 0, %s139
      %s141 = sphi 0, %s139
      %s142 = sphi 0, %s141
      %s156 = sphi 0, %s142
      %s160 = sphi 0, %s160
      %s162 = sphi 0, %s160
      %s163 = sphi 0, %s162
      %s177 = sphi 0, %s163
      %s181 = sphi 0, %s181
      %s183 = sphi 0, %s181
      %s184 = sphi 0, %s183
      %s198 = sphi 0, %s184
      %s202 = sphi 0, %s202
      %s204 = sphi 0, %s202
      %s205 = sphi 0, %s204
      %s219 = sphi 0, %s205
    $region4: #{gru_decoder_decode.1} parent=1 // loop_header_branch
      %29 = sbr.rel (%p27) target = $region8
    $region5: #{gru_decoder_decode.1} parent=1 // loop_body
      %s31 = ssub.s32 %s26, 1
      %s32 = ssub.s32 %s26, 2
      %s33 = sadd.s32 %s26, 1
      %s35 = sadd.s32 %s34, 1
      %p38 = scmp.eq.s32.totalorder %s26, 7
      %p39 = scmp.ne.s32.totalorder %s34, %s36
      %p40 = scmp.eq.s32.totalorder %s26, 0
      %p41 = por %p39, %p40
      %p42 = scmp.ne.s32.totalorder %s34, %s36
      %p43 = scmp.eq.s32.totalorder %s31, 7
      %p44 = por %p42, %p43
      %p45 = scmp.ne.s32.totalorder %s36, %s37
      %p46 = scmp.eq.s32.totalorder %s31, 0
      %p47 = por %p45, %p46
      %p48 = scmp.ne.s32.totalorder %s36, %s37
      %p49 = scmp.eq.s32.totalorder %s32, 7
      %p50 = por %p48, %p49
      %p52 = scmp.ne.s32.totalorder %s37, %s51
      %p53 = scmp.eq.s32.totalorder %s32, 0
      %p54 = por %p52, %p53
      %s56 = sadd.s32 %s55, 1
      %p59 = scmp.eq.s32.totalorder %s26, 7
      %p60 = scmp.ne.s32.totalorder %s55, %s57
      %p61 = scmp.eq.s32.totalorder %s26, 0
      %p62 = por %p60, %p61
      %p63 = scmp.ne.s32.totalorder %s55, %s57
      %p64 = scmp.eq.s32.totalorder %s31, 7
      %p65 = por %p63, %p64
      %p66 = scmp.ne.s32.totalorder %s57, %s58
      %p67 = scmp.eq.s32.totalorder %s31, 0
      %p68 = por %p66, %p67
      %p69 = scmp.ne.s32.totalorder %s57, %s58
      %p70 = scmp.eq.s32.totalorder %s32, 7
      %p71 = por %p69, %p70
      %p73 = scmp.ne.s32.totalorder %s58, %s72
      %p74 = scmp.eq.s32.totalorder %s32, 0
      %p75 = por %p73, %p74
      %s77 = sadd.s32 %s76, 1
      %p80 = scmp.eq.s32.totalorder %s26, 7
      %p81 = scmp.ne.s32.totalorder %s76, %s78
      %p82 = scmp.eq.s32.totalorder %s26, 0
      %p83 = por %p81, %p82
      %p84 = scmp.ne.s32.totalorder %s76, %s78
      %p85 = scmp.eq.s32.totalorder %s31, 7
      %p86 = por %p84, %p85
      %p87 = scmp.ne.s32.totalorder %s78, %s79
      %p88 = scmp.eq.s32.totalorder %s31, 0
      %p89 = por %p87, %p88
      %p90 = scmp.ne.s32.totalorder %s78, %s79
      %p91 = scmp.eq.s32.totalorder %s32, 7
      %p92 = por %p90, %p91
      %p94 = scmp.ne.s32.totalorder %s79, %s93
      %p95 = scmp.eq.s32.totalorder %s32, 0
      %p96 = por %p94, %p95
      %s98 = sadd.s32 %s97, 1
      %p101 = scmp.eq.s32.totalorder %s26, 7
      %p102 = scmp.ne.s32.totalorder %s97, %s99
      %p103 = scmp.eq.s32.totalorder %s26, 0
      %p104 = por %p102, %p103
      %p105 = scmp.ne.s32.totalorder %s97, %s99
      %p106 = scmp.eq.s32.totalorder %s31, 7
      %p107 = por %p105, %p106
      %p108 = scmp.ne.s32.totalorder %s99, %s100
      %p109 = scmp.eq.s32.totalorder %s31, 0
      %p110 = por %p108, %p109
      %p111 = scmp.ne.s32.totalorder %s99, %s100
      %p112 = scmp.eq.s32.totalorder %s32, 7
      %p113 = por %p111, %p112
      %p115 = scmp.ne.s32.totalorder %s100, %s114
      %p116 = scmp.eq.s32.totalorder %s32, 0
      %p117 = por %p115, %p116
      %s119 = sadd.s32 %s118, 1
      %p122 = scmp.eq.s32.totalorder %s26, 7
      %p123 = scmp.ne.s32.totalorder %s118, %s120
      %p124 = scmp.eq.s32.totalorder %s26, 0
      %p125 = por %p123, %p124
      %p126 = scmp.ne.s32.totalorder %s118, %s120
      %p127 = scmp.eq.s32.totalorder %s31, 7
      %p128 = por %p126, %p127
      %p129 = scmp.ne.s32.totalorder %s120, %s121
      %p130 = scmp.eq.s32.totalorder %s31, 0
      %p131 = por %p129, %p130
      %p132 = scmp.ne.s32.totalorder %s120, %s121
      %p133 = scmp.eq.s32.totalorder %s32, 7
      %p134 = por %p132, %p133
      %p136 = scmp.ne.s32.totalorder %s121, %s135
      %p137 = scmp.eq.s32.totalorder %s32, 0
      %p138 = por %p136, %p137
      %s140 = sadd.s32 %s139, 1
      %p143 = scmp.eq.s32.totalorder %s26, 7
      %p144 = scmp.ne.s32.totalorder %s139, %s141
      %p145 = scmp.eq.s32.totalorder %s26, 0
      %p146 = por %p144, %p145
      %p147 = scmp.ne.s32.totalorder %s139, %s141
      %p148 = scmp.eq.s32.totalorder %s31, 7
      %p149 = por %p147, %p148
      %p150 = scmp.ne.s32.totalorder %s141, %s142
      %p151 = scmp.eq.s32.totalorder %s31, 0
      %p152 = por %p150, %p151
      %p153 = scmp.ne.s32.totalorder %s141, %s142
      %p154 = scmp.eq.s32.totalorder %s32, 7
      %p155 = por %p153, %p154
      %p157 = scmp.ne.s32.totalorder %s142, %s156
      %p158 = scmp.eq.s32.totalorder %s32, 0
      %p159 = por %p157, %p158
      %s161 = sadd.s32 %s160, 1
      %p164 = scmp.eq.s32.totalorder %s26, 7
      %p165 = scmp.ne.s32.totalorder %s160, %s162
      %p166 = scmp.eq.s32.totalorder %s26, 0
      %p167 = por %p165, %p166
      %p168 = scmp.ne.s32.totalorder %s160, %s162
      %p169 = scmp.eq.s32.totalorder %s31, 7
      %p170 = por %p168, %p169
      %p171 = scmp.ne.s32.totalorder %s162, %s163
      %p172 = scmp.eq.s32.totalorder %s31, 0
      %p173 = por %p171, %p172
      %p174 = scmp.ne.s32.totalorder %s162, %s163
      %p175 = scmp.eq.s32.totalorder %s32, 7
      %p176 = por %p174, %p175
      %p178 = scmp.ne.s32.totalorder %s163, %s177
      %p179 = scmp.eq.s32.totalorder %s32, 0
      %p180 = por %p178, %p179
      %s182 = sadd.s32 %s181, 1
      %p185 = scmp.eq.s32.totalorder %s26, 7
      %p186 = scmp.ne.s32.totalorder %s181, %s183
      %p187 = scmp.eq.s32.totalorder %s26, 0
      %p188 = por %p186, %p187
      %p189 = scmp.ne.s32.totalorder %s181, %s183
      %p190 = scmp.eq.s32.totalorder %s31, 7
      %p191 = por %p189, %p190
      %p192 = scmp.ne.s32.totalorder %s183, %s184
      %p193 = scmp.eq.s32.totalorder %s31, 0
      %p194 = por %p192, %p193
      %p195 = scmp.ne.s32.totalorder %s183, %s184
      %p196 = scmp.eq.s32.totalorder %s32, 7
      %p197 = por %p195, %p196
      %p199 = scmp.ne.s32.totalorder %s184, %s198
      %p200 = scmp.eq.s32.totalorder %s32, 0
      %p201 = por %p199, %p200
      %s203 = sadd.s32 %s202, 1
      %p206 = scmp.eq.s32.totalorder %s26, 7
      %p207 = scmp.ne.s32.totalorder %s202, %s204
      %p208 = scmp.eq.s32.totalorder %s26, 0
      %p209 = por %p207, %p208
      %p210 = scmp.ne.s32.totalorder %s202, %s204
      %p211 = scmp.eq.s32.totalorder %s31, 7
      %p212 = por %p210, %p211
      %p213 = scmp.ne.s32.totalorder %s204, %s205
      %p214 = scmp.eq.s32.totalorder %s31, 0
      %p215 = por %p213, %p214
      %p216 = scmp.ne.s32.totalorder %s204, %s205
      %p217 = scmp.eq.s32.totalorder %s32, 7
      %p218 = por %p216, %p217
      %p220 = scmp.ne.s32.totalorder %s205, %s219
      %p221 = scmp.eq.s32.totalorder %s32, 0
      %p222 = por %p220, %p221
      %p223 = scmp.le.s32.totalorder 1, %s26
      %p224 = scmp.lt.s32.totalorder %s26, 9
      %p225 = pnand %p223, %p224
      %p226 = pneg %p225
      // Predicated region
      $region9: #{gru_decoder_decode.1} parent=5 // pred_check
        _
      $region10: #{gru_decoder_decode.1} parent=5 // pred_check_branch
        %228 = sbr.rel (%p225) target = $region12
      $region11: #{gru_decoder_decode.1} parent=5 // pred_region
        %s229 = ssub.s32 %s26, 1
        // Predicated region
        $region13: #{gru_decoder_decode.1} parent=11 // pred_check
          %p230 = pneg %p47
        $region14: #{gru_decoder_decode.1} parent=11 // pred_check_branch
          %232 = sbr.rel (%p230) target = $region16
        $region15: #{gru_decoder_decode.1} parent=11 // pred_region
          %s234 = ssub.s32 768, 768
          %235 = vsyncadd [#allocation7], %s234
          %s236 = sshll.u32 [#allocation6], 4
          %s237 = int_to_ptr.vmem [resolvable:$true] %s236
          %242 = dma.hbm_to_vmem [thread:$0]  %s1, 768, %s237, [#allocation7], 128, 128, 8
        $region16: #{gru_decoder_decode.1} parent=11 // pred_fallthru
          _
        // Predicated region
        $region17: #{gru_decoder_decode.1} parent=11 // pred_check
          %p243 = pneg %p68
        $region18: #{gru_decoder_decode.1} parent=11 // pred_check_branch
          %245 = sbr.rel (%p243) target = $region20
        $region19: #{gru_decoder_decode.1} parent=11 // pred_region
          _
        $region20: #{gru_decoder_decode.1} parent=11 // pred_fallthru
          _
        // Predicated region
        $region21: #{gru_decoder_decode.1} parent=11 // pred_check
          %p246 = pneg %p89
        $region22: #{gru_decoder_decode.1} parent=11 // pred_check_branch
          %248 = sbr.rel (%p246) target = $region24
        $region23: #{gru_decoder_decode.1} parent=11 // pred_region
          %s250 = ssub.s32 16384, 16384
          %251 = vsyncadd [#allocation10], %s250
          %s252 = sshll.u32 [#allocation9], 4
          %s253 = int_to_ptr.vmem [resolvable:$true] %s252
          %258 = dma.hbm_to_vmem [thread:$0]  %s3, 16384, %s253, [#allocation10], 512, 512, 32
        $region24: #{gru_decoder_decode.1} parent=11 // pred_fallthru
          _
        // Predicated region
        $region25: #{gru_decoder_decode.1} parent=11 // pred_check
          %p259 = pneg %p110
        $region26: #{gru_decoder_decode.1} parent=11 // pred_check_branch
          %261 = sbr.rel (%p259) target = $region28
        $region27: #{gru_decoder_decode.1} parent=11 // pred_region
          _
        $region28: #{gru_decoder_decode.1} parent=11 // pred_fallthru
          _
        // Predicated region
        $region29: #{gru_decoder_decode.1} parent=11 // pred_check
          %p262 = pneg %p131
        $region30: #{gru_decoder_decode.1} parent=11 // pred_check_branch
          %264 = sbr.rel (%p262) target = $region32
        $region31: #{gru_decoder_decode.1} parent=11 // pred_region
          %s266 = ssub.s32 2048, 2048
          %267 = vsyncadd [#allocation10], %s266
          %s268 = sshll.u32 [#allocation11], 4
          %s269 = int_to_ptr.vmem [resolvable:$true] %s268
          %274 = dma.hbm_to_vmem [thread:$0]  %s5, 2048, %s269, [#allocation10], 128, 128, 8
        $region32: #{gru_decoder_decode.1} parent=11 // pred_fallthru
          _
        // Predicated region
        $region33: #{gru_decoder_decode.1} parent=11 // pred_check
          %p275 = pneg %p152
        $region34: #{gru_decoder_decode.1} parent=11 // pred_check_branch
          %277 = sbr.rel (%p275) target = $region36
        $region35: #{gru_decoder_decode.1} parent=11 // pred_region
          _
        $region36: #{gru_decoder_decode.1} parent=11 // pred_fallthru
          _
        // Predicated region
        $region37: #{gru_decoder_decode.1} parent=11 // pred_check
          %p278 = pneg %p173
        $region38: #{gru_decoder_decode.1} parent=11 // pred_check_branch
          %280 = sbr.rel (%p278) target = $region40
        $region39: #{gru_decoder_decode.1} parent=11 // pred_region
          _
        $region40: #{gru_decoder_decode.1} parent=11 // pred_fallthru
          _
      $region12: #{gru_decoder_decode.1} parent=5 // pred_fallthru
        _
      %p281 = scmp.lt.s32.totalorder %s26, 8
      // Predicated region
      $region41: #{gru_decoder_decode.1} parent=5 // pred_check
        %p282 = pneg %p281
      $region42: #{gru_decoder_decode.1} parent=5 // pred_check_branch
        %284 = sbr.rel (%p282) target = $region44
      $region43: #{gru_decoder_decode.1} parent=5 // pred_region
        _
      $region44: #{gru_decoder_decode.1} parent=5 // pred_fallthru
        _
      %p285 = scmp.le.s32.totalorder 1, %s26
      %p286 = scmp.lt.s32.totalorder %s26, 9
      %p287 = pnand %p285, %p286
      %p288 = pneg %p287
      // Predicated region
      $region45: #{gru_decoder_decode.1} parent=5 // pred_check
        _
      $region46: #{gru_decoder_decode.1} parent=5 // pred_check_branch
        %290 = sbr.rel (%p287) target = $region48
      $region47: #{gru_decoder_decode.1} parent=5 // pred_region
        %s291 = ssub.s32 %s26, 1
        // Predicated region
        $region49: #{gru_decoder_decode.1} parent=47 // pred_check
          %p292 = pneg %p47
        $region50: #{gru_decoder_decode.1} parent=47 // pred_check_branch
          %294 = sbr.rel (%p292) target = $region52
        $region51: #{gru_decoder_decode.1} parent=47 // pred_region
          %295 = dma.done [#allocation7], 768
        $region52: #{gru_decoder_decode.1} parent=47 // pred_fallthru
          _
        // Predicated region
        $region53: #{gru_decoder_decode.1} parent=47 // pred_check
          %p296 = pneg %p89
        $region54: #{gru_decoder_decode.1} parent=47 // pred_check_branch
          %298 = sbr.rel (%p296) target = $region56
        $region55: #{gru_decoder_decode.1} parent=47 // pred_region
          %299 = dma.done [#allocation10], 16384
        $region56: #{gru_decoder_decode.1} parent=47 // pred_fallthru
          _
        // Predicated region
        $region57: #{gru_decoder_decode.1} parent=47 // pred_check
          %p300 = pneg %p131
        $region58: #{gru_decoder_decode.1} parent=47 // pred_check_branch
          %302 = sbr.rel (%p300) target = $region60
        $region59: #{gru_decoder_decode.1} parent=47 // pred_region
          %303 = dma.done [#allocation10], 2048
        $region60: #{gru_decoder_decode.1} parent=47 // pred_fallthru
          _
        %p304 = pneg %p47
        %p305 = pneg %p44
        %p306 = pneg %p68
        %p307 = pneg %p65
        %p308 = pneg %p89
        %p309 = pneg %p86
        %p310 = pneg %p110
        %p311 = pneg %p107
        %p312 = pneg %p131
        %p313 = pneg %p128
        %p314 = pneg %p152
        %p315 = pneg %p149
        %p316 = pneg %p173
        %p317 = pneg %p170
        %p318 = pneg %p194
        %p319 = pneg %p191
        %p320 = pneg %p215
        %p321 = pneg %p212
        %p322 = scmp.eq.s32.totalorder %s31, 0
        // Predicated region
        $region61: #{gru_decoder_decode.1} parent=47 // pred_check
          %p323 = pneg %p322
        $region62: #{gru_decoder_decode.1} parent=47 // pred_check_branch
          %325 = sbr.rel (%p323) target = $region64
        $region63: #{gru_decoder_decode.1} parent=47 // pred_region
          %v326 = vld [vmem:[%s2] sm:$0x1]
          %327 = vst [vmem:[#allocation2] sm:$0x1] %v326
        $region64: #{gru_decoder_decode.1} parent=47 // pred_fallthru
          _
        %s328 = sld [smem:[#allocation4 + %s31]]
        %s329 = scalar_lea.vmem [#allocation6], %s328
        %v330 = vld [vmem:[%s329] sm:$0x1]
        %s331 = sld [smem:[#allocation5]]
        %vm332 = vcmp.gt.f32.partialorder %v330, 0.0
        %v333 = vstv %s331
        %v334 = vmul.f32 %v333, %v330
        %v335 = vsel %vm332, %v330, %v334
        %v336 = vld [vmem:[#allocation2] sm:$0x1]
        %v337 = vld [vmem:[#allocation9] sm:$0xff]
        %v338 = vld [vmem:[#allocation9 + $0x8] sm:$0xff]
        %v339 = vld [vmem:[#allocation9 + $0x10] sm:$0xff]
        %v340 = vld [vmem:[#allocation9 + $0x18] sm:$0xff]
        %v341 = vld [vmem:[#allocation9 + $0x20] sm:$0xff]
        %v342 = vld [vmem:[#allocation9 + $0x28] sm:$0xff]
        %v343 = vld [vmem:[#allocation9 + $0x30] sm:$0xff]
        %v344 = vld [vmem:[#allocation9 + $0x38] sm:$0xff]
        %v345 = vld [vmem:[#allocation9 + $0x40] sm:$0xff]
        %v346 = vld [vmem:[#allocation9 + $0x48] sm:$0xff]
        %v347 = vld [vmem:[#allocation9 + $0x50] sm:$0xff]
        %v348 = vld [vmem:[#allocation9 + $0x58] sm:$0xff]
        %v349 = vld [vmem:[#allocation9 + $0x60] sm:$0xff]
        %v350 = vld [vmem:[#allocation9 + $0x68] sm:$0xff]
        %v351 = vld [vmem:[#allocation9 + $0x70] sm:$0xff]
        %v352 = vld [vmem:[#allocation9 + $0x78] sm:$0xff]
        %v353 = vld [vmem:[#allocation9 + $0x80] sm:$0xff]
        %v354 = vld [vmem:[#allocation9 + $0x88] sm:$0xff]
        %v355 = vld [vmem:[#allocation9 + $0x90] sm:$0xff]
        %v356 = vld [vmem:[#allocation9 + $0x98] sm:$0xff]
        %v357 = vld [vmem:[#allocation9 + $0xa0] sm:$0xff]
        %v358 = vld [vmem:[#allocation9 + $0xa8] sm:$0xff]
        %v359 = vld [vmem:[#allocation9 + $0xb0] sm:$0xff]
        %v360 = vld [vmem:[#allocation9 + $0xb8] sm:$0xff]
        %v361 = vld [vmem:[#allocation9 + $0xc0] sm:$0xff]
        %v362 = vld [vmem:[#allocation9 + $0xc8] sm:$0xff]
        %v363 = vld [vmem:[#allocation9 + $0xd0] sm:$0xff]
        %v364 = vld [vmem:[#allocation9 + $0xd8] sm:$0xff]
        %v365 = vld [vmem:[#allocation9 + $0xe0] sm:$0xff]
        %v366 = vld [vmem:[#allocation9 + $0xe8] sm:$0xff]
        %v367 = vld [vmem:[#allocation9 + $0xf0] sm:$0xff]
        %v368 = vld [vmem:[#allocation9 + $0xf8] sm:$0xff]
        %v369 = vld [vmem:[#allocation9 + $0x100] sm:$0xff]
        %v370 = vld [vmem:[#allocation9 + $0x108] sm:$0xff]
        %v371 = vld [vmem:[#allocation9 + $0x110] sm:$0xff]
        %v372 = vld [vmem:[#allocation9 + $0x118] sm:$0xff]
        %v373 = vld [vmem:[#allocation9 + $0x120] sm:$0xff]
        %v374 = vld [vmem:[#allocation9 + $0x128] sm:$0xff]
        %v375 = vld [vmem:[#allocation9 + $0x130] sm:$0xff]
        %v376 = vld [vmem:[#allocation9 + $0x138] sm:$0xff]
        %v377 = vld [vmem:[#allocation9 + $0x140] sm:$0xff]
        %v378 = vld [vmem:[#allocation9 + $0x148] sm:$0xff]
        %v379 = vld [vmem:[#allocation9 + $0x150] sm:$0xff]
        %v380 = vld [vmem:[#allocation9 + $0x158] sm:$0xff]
        %v381 = vld [vmem:[#allocation9 + $0x160] sm:$0xff]
        %v382 = vld [vmem:[#allocation9 + $0x168] sm:$0xff]
        %v383 = vld [vmem:[#allocation9 + $0x170] sm:$0xff]
        %v384 = vld [vmem:[#allocation9 + $0x178] sm:$0xff]
        %v385 = vld [vmem:[#allocation9 + $0x180] sm:$0xff]
        %v386 = vld [vmem:[#allocation9 + $0x188] sm:$0xff]
        %v387 = vld [vmem:[#allocation9 + $0x190] sm:$0xff]
        %v388 = vld [vmem:[#allocation9 + $0x198] sm:$0xff]
        %v389 = vld [vmem:[#allocation9 + $0x1a0] sm:$0xff]
        %v390 = vld [vmem:[#allocation9 + $0x1a8] sm:$0xff]
        %v391 = vld [vmem:[#allocation9 + $0x1b0] sm:$0xff]
        %v392 = vld [vmem:[#allocation9 + $0x1b8] sm:$0xff]
        %v393 = vld [vmem:[#allocation9 + $0x1c0] sm:$0xff]
        %v394 = vld [vmem:[#allocation9 + $0x1c8] sm:$0xff]
        %v395 = vld [vmem:[#allocation9 + $0x1d0] sm:$0xff]
        %v396 = vld [vmem:[#allocation9 + $0x1d8] sm:$0xff]
        %v397 = vld [vmem:[#allocation9 + $0x1e0] sm:$0xff]
        %v398 = vld [vmem:[#allocation9 + $0x1e8] sm:$0xff]
        %v399 = vld [vmem:[#allocation9 + $0x1f0] sm:$0xff]
        %v400 = vld [vmem:[#allocation9 + $0x1f8] sm:$0xff]
        %v401 = vld [vmem:[#allocation9 + $0x200] sm:$0xff]
        %v402 = vld [vmem:[#allocation9 + $0x208] sm:$0xff]
        %v403 = vld [vmem:[#allocation9 + $0x210] sm:$0xff]
        %v404 = vld [vmem:[#allocation9 + $0x218] sm:$0xff]
        %v405 = vld [vmem:[#allocation9 + $0x220] sm:$0xff]
        %v406 = vld [vmem:[#allocation9 + $0x228] sm:$0xff]
        %v407 = vld [vmem:[#allocation9 + $0x230] sm:$0xff]
        %v408 = vld [vmem:[#allocation9 + $0x238] sm:$0xff]
        %v409 = vld [vmem:[#allocation9 + $0x240] sm:$0xff]
        %v410 = vld [vmem:[#allocation9 + $0x248] sm:$0xff]
        %v411 = vld [vmem:[#allocation9 + $0x250] sm:$0xff]
        %v412 = vld [vmem:[#allocation9 + $0x258] sm:$0xff]
        %v413 = vld [vmem:[#allocation9 + $0x260] sm:$0xff]
        %v414 = vld [vmem:[#allocation9 + $0x268] sm:$0xff]
        %v415 = vld [vmem:[#allocation9 + $0x270] sm:$0xff]
        %v416 = vld [vmem:[#allocation9 + $0x278] sm:$0xff]
        %v417 = vld [vmem:[#allocation9 + $0x280] sm:$0xff]
        %v418 = vld [vmem:[#allocation9 + $0x288] sm:$0xff]
        %v419 = vld [vmem:[#allocation9 + $0x290] sm:$0xff]
        %v420 = vld [vmem:[#allocation9 + $0x298] sm:$0xff]
        %v421 = vld [vmem:[#allocation9 + $0x2a0] sm:$0xff]
        %v422 = vld [vmem:[#allocation9 + $0x2a8] sm:$0xff]
        %v423 = vld [vmem:[#allocation9 + $0x2b0] sm:$0xff]
        %v424 = vld [vmem:[#allocation9 + $0x2b8] sm:$0xff]
        %v425 = vld [vmem:[#allocation9 + $0x2c0] sm:$0xff]
        %v426 = vld [vmem:[#allocation9 + $0x2c8] sm:$0xff]
        %v427 = vld [vmem:[#allocation9 + $0x2d0] sm:$0xff]
        %v428 = vld [vmem:[#allocation9 + $0x2d8] sm:$0xff]
        %v429 = vld [vmem:[#allocation9 + $0x2e0] sm:$0xff]
        %v430 = vld [vmem:[#allocation9 + $0x2e8] sm:$0xff]
        %v431 = vld [vmem:[#allocation9 + $0x2f0] sm:$0xff]
        %v432 = vld [vmem:[#allocation9 + $0x2f8] sm:$0xff]
        %v433 = vld [vmem:[#allocation9 + $0x300] sm:$0xff]
        %v434 = vld [vmem:[#allocation9 + $0x308] sm:$0xff]
        %v435 = vld [vmem:[#allocation9 + $0x310] sm:$0xff]
        %v436 = vld [vmem:[#allocation9 + $0x318] sm:$0xff]
        %v437 = vld [vmem:[#allocation9 + $0x320] sm:$0xff]
        %v438 = vld [vmem:[#allocation9 + $0x328] sm:$0xff]
        %v439 = vld [vmem:[#allocation9 + $0x330] sm:$0xff]
        %v440 = vld [vmem:[#allocation9 + $0x338] sm:$0xff]
        %v441 = vld [vmem:[#allocation9 + $0x340] sm:$0xff]
        %v442 = vld [vmem:[#allocation9 + $0x348] sm:$0xff]
        %v443 = vld [vmem:[#allocation9 + $0x350] sm:$0xff]
        %v444 = vld [vmem:[#allocation9 + $0x358] sm:$0xff]
        %v445 = vld [vmem:[#allocation9 + $0x360] sm:$0xff]
        %v446 = vld [vmem:[#allocation9 + $0x368] sm:$0xff]
        %v447 = vld [vmem:[#allocation9 + $0x370] sm:$0xff]
        %v448 = vld [vmem:[#allocation9 + $0x378] sm:$0xff]
        %v449 = vld [vmem:[#allocation9 + $0x380] sm:$0xff]
        %v450 = vld [vmem:[#allocation9 + $0x388] sm:$0xff]
        %v451 = vld [vmem:[#allocation9 + $0x390] sm:$0xff]
        %v452 = vld [vmem:[#allocation9 + $0x398] sm:$0xff]
        %v453 = vld [vmem:[#allocation9 + $0x3a0] sm:$0xff]
        %v454 = vld [vmem:[#allocation9 + $0x3a8] sm:$0xff]
        %v455 = vld [vmem:[#allocation9 + $0x3b0] sm:$0xff]
        %v456 = vld [vmem:[#allocation9 + $0x3b8] sm:$0xff]
        %v457 = vld [vmem:[#allocation9 + $0x3c0] sm:$0xff]
        %v458 = vld [vmem:[#allocation9 + $0x3c8] sm:$0xff]
        %v459 = vld [vmem:[#allocation9 + $0x3d0] sm:$0xff]
        %v460 = vld [vmem:[#allocation9 + $0x3d8] sm:$0xff]
        %v461 = vld [vmem:[#allocation9 + $0x3e0] sm:$0xff]
        %v462 = vld [vmem:[#allocation9 + $0x3e8] sm:$0xff]
        %v463 = vld [vmem:[#allocation9 + $0x3f0] sm:$0xff]
        %v464 = vld [vmem:[#allocation9 + $0x3f8] sm:$0xff]
        %v465 = vld [vmem:[%s4] sm:$0xf]
        %v467 = vlaneseq
        %v468 = vshrl.u32 %v467, 7
        %v469 = vsub.s32 0, %v468
        %v470 = vrot.slane %v465, %v469
        %v471 = vlaneseq
        %v472 = vshrl.u32 %v471, 7
        %v473 = vsub.s32 1, %v472
        %v474 = vrot.slane %v465, %v473
        %v475 = vlaneseq
        %v476 = vshrl.u32 %v475, 7
        %v477 = vsub.s32 2, %v476
        %v478 = vrot.slane %v465, %v477
        %v479 = vlaneseq
        %v480 = vshrl.u32 %v479, 7
        %v481 = vsub.s32 3, %v480
        %v482 = vrot.slane %v465, %v481
        %487 = vmatprep.subr.mxu0 %v338
        %488 = vmatpush1.msra.mxu0 %v337
        %489 = vmatprep.subr.mxu0 %v342
        %490 = vmatpush1.msra.mxu0 %v341
        %491 = vmatprep.subr.mxu0 %v346
        %492 = vmatpush1.msra.mxu0 %v345
        %493 = vmatprep.subr.mxu0 %v350
        %494 = vmatpush1.msra.mxu0 %v349
        %495 = vmatprep.subr.mxu0 %v354
        %496 = vmatpush1.msra.mxu0 %v353
        %497 = vmatprep.subr.mxu0 %v358
        %498 = vmatpush1.msra.mxu0 %v357
        %499 = vmatprep.subr.mxu0 %v362
        %500 = vmatpush1.msra.mxu0 %v361
        %501 = vmatprep.subr.mxu0 %v366
        %502 = vmatpush1.msra.mxu0 %v365
        %503 = vmatprep.subr.mxu0 %v370
        %504 = vmatpush1.msra.mxu0 %v369
        %505 = vmatprep.subr.mxu0 %v374
        %506 = vmatpush1.msra.mxu0 %v373
        %507 = vmatprep.subr.mxu0 %v378
        %508 = vmatpush1.msra.mxu0 %v377
        %509 = vmatprep.subr.mxu0 %v382
        %510 = vmatpush1.msra.mxu0 %v381
        %511 = vmatprep.subr.mxu0 %v386
        %512 = vmatpush1.msra.mxu0 %v385
        %513 = vmatprep.subr.mxu0 %v390
        %514 = vmatpush1.msra.mxu0 %v389
        %515 = vmatprep.subr.mxu0 %v394
        %516 = vmatpush1.msra.mxu0 %v393
        %517 = vmatprep.subr.mxu0 %v398
        %518 = vmatpush1.msra.mxu0 %v397
        %519 = vmatprep.subr.mxu0 %v402
        %520 = vmatpush1.msra.mxu0 %v401
        %521 = vmatprep.subr.mxu0 %v406
        %522 = vmatpush1.msra.mxu0 %v405
        %523 = vmatprep.subr.mxu0 %v410
        %524 = vmatpush1.msra.mxu0 %v409
        %525 = vmatprep.subr.mxu0 %v414
        %526 = vmatpush1.msra.mxu0 %v413
        %527 = vmatprep.subr.mxu0 %v418
        %528 = vmatpush1.msra.mxu0 %v417
        %529 = vmatprep.subr.mxu0 %v422
        %530 = vmatpush1.msra.mxu0 %v421
        %531 = vmatprep.subr.mxu0 %v426
        %532 = vmatpush1.msra.mxu0 %v425
        %533 = vmatprep.subr.mxu0 %v430
        %534 = vmatpush1.msra.mxu0 %v429
        %535 = vmatprep.subr.mxu0 %v434
        %536 = vmatpush1.msra.mxu0 %v433
        %537 = vmatprep.subr.mxu0 %v438
        %538 = vmatpush1.msra.mxu0 %v437
        %539 = vmatprep.subr.mxu0 %v442
        %540 = vmatpush1.msra.mxu0 %v441
        %541 = vmatprep.subr.mxu0 %v446
        %542 = vmatpush1.msra.mxu0 %v445
        %543 = vmatprep.subr.mxu0 %v450
        %544 = vmatpush1.msra.mxu0 %v449
        %545 = vmatprep.subr.mxu0 %v454
        %546 = vmatpush1.msra.mxu0 %v453
        %547 = vmatprep.subr.mxu0 %v458
        %548 = vmatpush1.msra.mxu0 %v457
        %549 = vmatprep.subr.mxu0 %v462
        %550 = vmatpush1.msra.mxu0 %v461
        %551 = vmatprep.mubr.f32.mxu0 %v336
        %552 = vmatmul.mubr.f32.gmra.mrb[0].mxu0 %v335
        %v553 = vpop.f32.mrb[0].mxu0
        %v554 = vadd.f32 %v470, %v553
        %v555 = vpop.f32.mrb[0].mxu0
        %v556 = vadd.f32 %v474, %v555
        %557 = vdwg.mxu0
        %558 = vmatprep.subr.mxu0 %v340
        %559 = vmatpush1.msra.mxu0 %v339
        %560 = vmatprep.subr.mxu0 %v344
        %561 = vmatpush1.msra.mxu0 %v343
        %562 = vmatprep.subr.mxu0 %v348
        %563 = vmatpush1.msra.mxu0 %v347
        %564 = vmatprep.subr.mxu0 %v352
        %565 = vmatpush1.msra.mxu0 %v351
        %566 = vmatprep.subr.mxu0 %v356
        %567 = vmatpush1.msra.mxu0 %v355
        %568 = vmatprep.subr.mxu0 %v360
        %569 = vmatpush1.msra.mxu0 %v359
        %570 = vmatprep.subr.mxu0 %v364
        %571 = vmatpush1.msra.mxu0 %v363
        %572 = vmatprep.subr.mxu0 %v368
        %573 = vmatpush1.msra.mxu0 %v367
        %574 = vmatprep.subr.mxu0 %v372
        %575 = vmatpush1.msra.mxu0 %v371
        %576 = vmatprep.subr.mxu0 %v376
        %577 = vmatpush1.msra.mxu0 %v375
        %578 = vmatprep.subr.mxu0 %v380
        %579 = vmatpush1.msra.mxu0 %v379
        %580 = vmatprep.subr.mxu0 %v384
        %581 = vmatpush1.msra.mxu0 %v383
        %582 = vmatprep.subr.mxu0 %v388
        %583 = vmatpush1.msra.mxu0 %v387
        %584 = vmatprep.subr.mxu0 %v392
        %585 = vmatpush1.msra.mxu0 %v391
        %586 = vmatprep.subr.mxu0 %v396
        %587 = vmatpush1.msra.mxu0 %v395
        %588 = vmatprep.subr.mxu0 %v400
        %589 = vmatpush1.msra.mxu0 %v399
        %590 = vmatprep.subr.mxu0 %v404
        %591 = vmatpush1.msra.mxu0 %v403
        %592 = vmatprep.subr.mxu0 %v408
        %593 = vmatpush1.msra.mxu0 %v407
        %594 = vmatprep.subr.mxu0 %v412
        %595 = vmatpush1.msra.mxu0 %v411
        %596 = vmatprep.subr.mxu0 %v416
        %597 = vmatpush1.msra.mxu0 %v415
        %598 = vmatprep.subr.mxu0 %v420
        %599 = vmatpush1.msra.mxu0 %v419
        %600 = vmatprep.subr.mxu0 %v424
        %601 = vmatpush1.msra.mxu0 %v423
        %602 = vmatprep.subr.mxu0 %v428
        %603 = vmatpush1.msra.mxu0 %v427
        %604 = vmatprep.subr.mxu0 %v432
        %605 = vmatpush1.msra.mxu0 %v431
        %606 = vmatprep.subr.mxu0 %v436
        %607 = vmatpush1.msra.mxu0 %v435
        %608 = vmatprep.subr.mxu0 %v440
        %609 = vmatpush1.msra.mxu0 %v439
        %610 = vmatprep.subr.mxu0 %v444
        %611 = vmatpush1.msra.mxu0 %v443
        %612 = vmatprep.subr.mxu0 %v448
        %613 = vmatpush1.msra.mxu0 %v447
        %614 = vmatprep.subr.mxu0 %v452
        %615 = vmatpush1.msra.mxu0 %v451
        %616 = vmatprep.subr.mxu0 %v456
        %617 = vmatpush1.msra.mxu0 %v455
        %618 = vmatprep.subr.mxu0 %v460
        %619 = vmatpush1.msra.mxu0 %v459
        %620 = vmatprep.subr.mxu0 %v464
        %621 = vmatpush1.msra.mxu0 %v463
        %622 = vmatprep.mubr.f32.mxu0 %v336
        %623 = vmatmul.mubr.f32.gmra.mrb[0].mxu0 %v335
        %v624 = vpop.f32.mrb[0].mxu0
        %v625 = vadd.f32 %v478, %v624
        %v626 = vpop.f32.mrb[0].mxu0
        %v627 = vadd.f32 %v482, %v626
        %628 = vdwg.mxu0
        %v629 = vxor.u32 %v554, 2147483648
        %v630 = vmul.f32 %v629, 1.442695
        %v631 = vpow.pop %v630
        %v632 = vadd.f32 %v631, 1.0
        %v633 = vrcp.pop %v632
        %v634 = vmul.f32 1.0, %v633
        %v635 = vxor.u32 %v556, 2147483648
        %v636 = vmul.f32 %v635, 1.442695
        %v637 = vpow.pop %v636
        %v638 = vadd.f32 %v637, 1.0
        %v639 = vrcp.pop %v638
        %v640 = vmul.f32 1.0, %v639
        %v641 = vmul.f32 %v634, %v627
        %v642 = vadd.f32 %v625, %v641
        %v643 = vtanh.pop %v642
        %v644 = vsub.f32 1.0, %v640
        %v645 = vmul.f32 %v644, %v643
        %v646 = vmul.f32 %v640, %v336
        %v647 = vadd.f32 %v645, %v646
        %v648 = vld [vmem:[#allocation11] sm:$0xff]
        %v649 = vld [vmem:[#allocation11 + $0x8] sm:$0xff]
        %v650 = vld [vmem:[#allocation11 + $0x10] sm:$0xff]
        %v651 = vld [vmem:[#allocation11 + $0x18] sm:$0xff]
        %v652 = vld [vmem:[#allocation11 + $0x20] sm:$0xff]
        %v653 = vld [vmem:[#allocation11 + $0x28] sm:$0xff]
        %v654 = vld [vmem:[#allocation11 + $0x30] sm:$0xff]
        %v655 = vld [vmem:[#allocation11 + $0x38] sm:$0xff]
        %v656 = vld [vmem:[#allocation11 + $0x40] sm:$0xff]
        %v657 = vld [vmem:[#allocation11 + $0x48] sm:$0xff]
        %v658 = vld [vmem:[#allocation11 + $0x50] sm:$0xff]
        %v659 = vld [vmem:[#allocation11 + $0x58] sm:$0xff]
        %v660 = vld [vmem:[#allocation11 + $0x60] sm:$0xff]
        %v661 = vld [vmem:[#allocation11 + $0x68] sm:$0xff]
        %v662 = vld [vmem:[#allocation11 + $0x70] sm:$0xff]
        %v663 = vld [vmem:[#allocation11 + $0x78] sm:$0xff]
        %v664 = vld [vmem:[%s6] sm:$0x1]
        %665 = vmatprep.subr.mxu0 0.0
        %666 = vmatpush1.msra.mxu0 %v648
        %667 = vmatprep.subr.mxu0 0.0
        %668 = vmatpush1.msra.mxu0 %v649
        %669 = vmatprep.subr.mxu0 0.0
        %670 = vmatpush1.msra.mxu0 %v650
        %671 = vmatprep.subr.mxu0 0.0
        %672 = vmatpush1.msra.mxu0 %v651
        %673 = vmatprep.subr.mxu0 0.0
        %674 = vmatpush1.msra.mxu0 %v652
        %675 = vmatprep.subr.mxu0 0.0
        %676 = vmatpush1.msra.mxu0 %v653
        %677 = vmatprep.subr.mxu0 0.0
        %678 = vmatpush1.msra.mxu0 %v654
        %679 = vmatprep.subr.mxu0 0.0
        %680 = vmatpush1.msra.mxu0 %v655
        %681 = vmatprep.subr.mxu0 0.0
        %682 = vmatpush1.msra.mxu0 %v656
        %683 = vmatprep.subr.mxu0 0.0
        %684 = vmatpush1.msra.mxu0 %v657
        %685 = vmatprep.subr.mxu0 0.0
        %686 = vmatpush1.msra.mxu0 %v658
        %687 = vmatprep.subr.mxu0 0.0
        %688 = vmatpush1.msra.mxu0 %v659
        %689 = vmatprep.subr.mxu0 0.0
        %690 = vmatpush1.msra.mxu0 %v660
        %691 = vmatprep.subr.mxu0 0.0
        %692 = vmatpush1.msra.mxu0 %v661
        %693 = vmatprep.subr.mxu0 0.0
        %694 = vmatpush1.msra.mxu0 %v662
        %695 = vmatprep.subr.mxu0 0.0
        %696 = vmatpush1.msra.mxu0 %v663
        %697 = vmatprep.subr.mxu0 0.0
        %698 = vmatpush1.msra.mxu0 0.0
        %699 = vmatprep.subr.mxu0 0.0
        %700 = vmatpush1.msra.mxu0 0.0
        %701 = vmatprep.subr.mxu0 0.0
        %702 = vmatpush1.msra.mxu0 0.0
        %703 = vmatprep.subr.mxu0 0.0
        %704 = vmatpush1.msra.mxu0 0.0
        %705 = vmatprep.subr.mxu0 0.0
        %706 = vmatpush1.msra.mxu0 0.0
        %707 = vmatprep.subr.mxu0 0.0
        %708 = vmatpush1.msra.mxu0 0.0
        %709 = vmatprep.subr.mxu0 0.0
        %710 = vmatpush1.msra.mxu0 0.0
        %711 = vmatprep.subr.mxu0 0.0
        %712 = vmatpush1.msra.mxu0 0.0
        %713 = vmatprep.subr.mxu0 0.0
        %714 = vmatpush1.msra.mxu0 0.0
        %715 = vmatprep.subr.mxu0 0.0
        %716 = vmatpush1.msra.mxu0 0.0
        %717 = vmatprep.subr.mxu0 0.0
        %718 = vmatpush1.msra.mxu0 0.0
        %719 = vmatprep.subr.mxu0 0.0
        %720 = vmatpush1.msra.mxu0 0.0
        %721 = vmatprep.subr.mxu0 0.0
        %722 = vmatpush1.msra.mxu0 0.0
        %723 = vmatprep.subr.mxu0 0.0
        %724 = vmatpush1.msra.mxu0 0.0
        %725 = vmatprep.subr.mxu0 0.0
        %726 = vmatpush1.msra.mxu0 0.0
        %727 = vmatprep.subr.mxu0 0.0
        %728 = vmatpush1.msra.mxu0 0.0
        %729 = vmatprep.mubr.f32.mxu0 0.0
        %730 = vmatmul.mubr.f32.gmra.mrb[0].mxu0 %v647
        %v731 = vpop.f32.mrb[0].mxu0
        %v732 = vadd.f32 %v664, %v731
        %v733 = vpop.f32.mrb[0].mxu0
        %734 = vdwg.mxu0
        %vm735 = vcmask 1040384
        %v736 = vsel %vm735, %v732, -inf
        %737 = vmax.xlane.f32.xlu0 %v736
        %v738 = vpop.xlane.xlu0 %737
        %v739 = vsub.f32 %v732, %v738
        %v740 = vmul.f32 %v739, 1.442695
        %v741 = vpow.pop %v740
        %v742 = vsel %vm735, %v741, 0.0
        %743 = vadd.xlane.f32.xlu0 %v742
        %v744 = vpop.xlane.xlu0 %743
        %v745 = vlog2.pop %v744
        %v746 = vmul.f32 %v745, 0.6931472
        %v747 = vsub.f32 %v739, %v746
        %s748 = scalar_lea.vmem [#allocation12], %s31
        %749 = vst [vmem:[%s748] sm:$0x1] %v747
        %750 = vst [vmem:[#allocation2] sm:$0x1] %v647
        %751 = vst [vmem:[%s9] sm:$0x1] %v647
        // Predicated region
        $region65: #{gru_decoder_decode.1} parent=47 // pred_check
          %p752 = pneg %p191
        $region66: #{gru_decoder_decode.1} parent=47 // pred_check_branch
          %754 = sbr.rel (%p752) target = $region68
        $region67: #{gru_decoder_decode.1} parent=47 // pred_region
          %s756 = ssub.s32 128, 128
          %757 = vsyncadd [#allocation8], %s756
          %s759 = sshll.u32 [#allocation12], 4
          %s760 = int_to_ptr.vmem [resolvable:$true] %s759
          %762 = dma.vmem_to_hbm [thread:$0]  %s760, 128, %s8, [#allocation8]
        $region68: #{gru_decoder_decode.1} parent=47 // pred_fallthru
          _
        // Predicated region
        $region69: #{gru_decoder_decode.1} parent=47 // pred_check
          %p763 = pneg %p212
        $region70: #{gru_decoder_decode.1} parent=47 // pred_check_branch
          %765 = sbr.rel (%p763) target = $region72
        $region71: #{gru_decoder_decode.1} parent=47 // pred_region
          _
        $region72: #{gru_decoder_decode.1} parent=47 // pred_fallthru
          _
        // Predicated region
        $region73: #{gru_decoder_decode.1} parent=47 // pred_check
          %p766 = pneg %p191
        $region74: #{gru_decoder_decode.1} parent=47 // pred_check_branch
          %768 = sbr.rel (%p766) target = $region76
        $region75: #{gru_decoder_decode.1} parent=47 // pred_region
          %769 = dma.done [#allocation8], 128
        $region76: #{gru_decoder_decode.1} parent=47 // pred_fallthru
          _
        // Predicated region
        $region77: #{gru_decoder_decode.1} parent=47 // pred_check
          %p770 = pneg %p212
        $region78: #{gru_decoder_decode.1} parent=47 // pred_check_branch
          %772 = sbr.rel (%p770) target = $region80
        $region79: #{gru_decoder_decode.1} parent=47 // pred_region
          _
        $region80: #{gru_decoder_decode.1} parent=47 // pred_fallthru
          _
      $region48: #{gru_decoder_decode.1} parent=5 // pred_fallthru
        _
      %p773 = scmp.le.s32.totalorder 2, %s26
      // Predicated region
      $region81: #{gru_decoder_decode.1} parent=5 // pred_check
        %p774 = pneg %p773
      $region82: #{gru_decoder_decode.1} parent=5 // pred_check_branch
        %776 = sbr.rel (%p774) target = $region84
      $region83: #{gru_decoder_decode.1} parent=5 // pred_region
        %s777 = ssub.s32 %s26, 2
      $region84: #{gru_decoder_decode.1} parent=5 // pred_fallthru
        _
    $region6: #{gru_decoder_decode.1} parent=1 // loop_footer
      %s30 = sadd.s32 1, %s26
    $region7: #{gru_decoder_decode.1} parent=1 // loop_footer_branch
      %25 = sbr.rel target = $region3
    $region8: #{gru_decoder_decode.1} parent=1 // loop_exit
      _
    %778 = vsyncpa [#allocation7], 1
    %s779 = scalar_lea.sflag [#allocation7], 1
    %780 = vsyncpa %s779, 1
    %781 = vsyncpa [#allocation10], 1
    %782 = vsyncpa [#allocation8], 1
    %s783 = scalar_lea.sflag [#allocation8], 1
    %784 = vsyncpa %s783, 1

</llo_original>
